<compile_context>
chip_gen: v5e
topology: v5e:2x2
jax: 0.10.0
libtpu: 0.0.40
codegen_flags: <defaults>
</compile_context>

<pallas_src>
import jax
import jax.numpy as jnp
from jax.experimental import pallas as pl
from jax.experimental.pallas import tpu as pltpu


def _round_up(v, m):
    return ((v + m - 1) // m) * m


def _conv_matmul_relu_kernel(p_ref, w_ref, o_ref, acc_ref):
    # p_ref: (tm, tk) bf16 im2col tile; w_ref: (tk, Fp) bf16 folded conv weight;
    # o_ref: (tm, Fp) output; acc_ref: (tm, Fp) f32 accumulator resident across K.
    @pl.when(pl.program_id(1) == 0)
    def _():
        acc_ref[...] = jnp.zeros_like(acc_ref)

    acc_ref[...] += jnp.dot(p_ref[...], w_ref[...],
                            preferred_element_type=jnp.float32)

    @pl.when(pl.program_id(1) == pl.num_programs(1) - 1)
    def _():
        o_ref[...] = jnp.maximum(acc_ref[...], 0.0).astype(o_ref.dtype)


@jax.jit
def random_cnn2d_forward(x, weight):
    """relu(conv2d(x, weight, stride=1, padding=0, bias=None)), NCHW in/out."""
    N, C, H, W = x.shape
    F, _, KH, KW = weight.shape
    OH, OW = H - KH + 1, W - KW + 1
    K = C * KH * KW
    M = N * OH * OW

    # ---- patch extraction: one fused XLA gather, output directly NHWC so the
    #      [M, K] reshape is layout-free. Feature ordering of the patch dim is
    #      (C, kh, kw), matching weight.reshape(F, C*KH*KW).
    x_bf = x.astype(jnp.bfloat16)
    p = jax.lax.conv_general_dilated_patches(
        x_bf, (KH, KW), (1, 1), "VALID",
        dimension_numbers=("NCHW", "OIHW", "NHWC"))      # [N, OH, OW, C*KH*KW]
    p = p.reshape(M, K)

    w2 = weight.reshape(F, K).T.astype(jnp.bfloat16)     # [K, F]

    # ---- MXU-aligned tiling (bf16 in, f32 accumulate) ----
    # tm: full 256-row MXU pass for large M; at small M only round up to the
    #     sublane multiple (8) so we don't compute on padding rows.
    tm = 256 if M >= 256 else _round_up(M, 8)
    Kp = _round_up(K, 128)
    tk = Kp if Kp <= 512 else 512         # K-reduction tile (keeps weight block small)
    Kp = _round_up(Kp, tk)
    Fp = _round_up(F, 128)                # lane-dense output stores
    Mp = _round_up(M, tm)

    p = jnp.pad(p, ((0, Mp - M), (0, Kp - K)))
    w2 = jnp.pad(w2, ((0, Kp - K), (0, Fp - F)))

    # VMEM budget per step (bf16 inputs, f32 acc/out): tm<=256, tk<=512,
    # Fp<=1024 stays well under the default scoped limit on v5e/v6e/v7x,
    # including double-buffered input blocks.
    cost = pl.CostEstimate(
        flops=2 * Mp * Kp * Fp,
        transcendentals=0,
        bytes_accessed=Mp * Kp * 2 + Kp * Fp * 2 + Mp * Fp * 4)

    out = pl.pallas_call(
        _conv_matmul_relu_kernel,
        out_shape=jax.ShapeDtypeStruct((Mp, Fp), x.dtype),
        grid_spec=pltpu.PrefetchScalarGridSpec(
            num_scalar_prefetch=0,
            grid=(Mp // tm, Kp // tk),                    # M parallel, K reduction last
            in_specs=[
                pl.BlockSpec((tm, tk), lambda i, k: (i, k)),
                pl.BlockSpec((tk, Fp), lambda i, k: (k, 0)),
            ],
            out_specs=pl.BlockSpec((tm, Fp), lambda i, k: (i, 0)),
            scratch_shapes=[pltpu.VMEM((tm, Fp), jnp.float32)]),
        compiler_params=pltpu.CompilerParams(
            dimension_semantics=("parallel", "arbitrary")),
        cost_estimate=cost,
    )(p, w2)

    # Keep the module's NCHW output layout (PyTorch Conv2d convention).
    # TODO(synk): consumers that accept NHWC (TPU-friendly, lane-dense F) can
    # drop this transpose pass entirely.
    out = out[:M, :F].reshape(N, OH, OW, F).transpose(0, 3, 1, 2)
    return out


def random_cnn2d_apply(x, params, out_keys):
    """Mirrors RandomCNN2d.forward(x, out_keys) for the default 1-layer config
    (n_layers=1, kernel (11,11), stride=1, padding=0, bias=False, bn=False,
    stack=False, activation=ReLU)."""
    outs = {"conv0": random_cnn2d_forward(x, params["conv0"])}
    return [outs[k] for k in out_keys]


if __name__ == "__main__":
    key = jax.random.PRNGKey(0)
    kx, kw = jax.random.split(key)

    # Small shapes consistent with defaults: n_channels_in=1, kernel (11,11), no pad.
    N, C, H, W = 2, 1, 16, 16
    Fn, KH, KW = 128, 11, 11          # n_filters reduced from 512 for a small test

    x = jax.random.normal(kx, (N, C, H, W), dtype=jnp.float32)

    # Deterministic parameter init (PyTorch Conv2d kaiming-uniform equivalent:
    # uniform(-1/sqrt(fan_in), 1/sqrt(fan_in)), bias=False).
    fan_in = C * KH * KW
    bound = 1.0 / (fan_in ** 0.5)
    weight = jax.random.uniform(kw, (Fn, C, KH, KW), dtype=jnp.float32,
                                minval=-bound, maxval=bound)
    params = {"conv0": weight}

    (y,) = random_cnn2d_apply(x, params, out_keys=["conv0"])
    y = jax.block_until_ready(y)

    # Pure-JAX f32 reference. Tolerance loosened because the kernel uses bf16
    # MXU inputs with f32 accumulation.
    ref = jax.lax.conv_general_dilated(
        x, weight, window_strides=(1, 1), padding="VALID",
        dimension_numbers=("NCHW", "OIHW", "NCHW"))
    ref = jnp.maximum(ref, 0.0)

    assert y.shape == (N, Fn, H - KH + 1, W - KW + 1), y.shape
    err = float(jnp.max(jnp.abs(y - ref)))
    assert jnp.allclose(y, ref, atol=5e-2, rtol=5e-2), err

    print("KERNEL_OK")
</pallas_src>

<mosaic_0001>
module attributes {stable_mosaic.version = 11 : i64} {
  func.func @_conv_matmul_relu_kernel(%arg0: i32, %arg1: i32, %arg2: memref<72x128xbf16, #tpu.memory_space<vmem>>, %arg3: memref<128x128xbf16, #tpu.memory_space<vmem>>, %arg4: memref<72x128xf32, #tpu.memory_space<vmem>>, %arg5: memref<72x128xf32, #tpu.memory_space<vmem>>) attributes {dimension_semantics = [#tpu.dimension_semantics<parallel>, #tpu.dimension_semantics<arbitrary>], iteration_bounds = array<i64: 1, 1>, scalar_prefetch = 0 : i64, scratch_operands = 1 : i64, tpu.core_type = #tpu.core_type<tc>, window_params = [{transform_indices = @transform_0, window_bounds = array<i64: 72, 128>}, {transform_indices = @transform_1, window_bounds = array<i64: 128, 128>}, {transform_indices = @transform_2, window_bounds = array<i64: 72, 128>}]} {
    %c0_i32 = arith.constant 0 : i32
    %0 = arith.cmpi eq, %arg1, %c0_i32 : i32
    %1 = arith.extui %0 : i1 to i32
    %c0_i32_0 = arith.constant 0 : i32
    %2 = arith.cmpi ne, %1, %c0_i32_0 : i32
    scf.if %2 {
      %cst_10 = arith.constant 0.000000e+00 : f32
      %12 = vector.broadcast %cst_10 : f32 to vector<72x128xf32>
      %c0_11 = arith.constant 0 : index
      %c0_12 = arith.constant 0 : index
      %13 = vector.load %arg5[%c0_11, %c0_12] : memref<72x128xf32, #tpu.memory_space<vmem>>, vector<72x128xf32>
      tpu.vector_store %arg5[%c0_11, %c0_12], %12 {strides = array<i32>} : memref<72x128xf32, #tpu.memory_space<vmem>>, vector<72x128xf32>,
    } else {
    }
    %c0 = arith.constant 0 : index
    %c0_1 = arith.constant 0 : index
    %3 = vector.load %arg5[%c0, %c0_1] : memref<72x128xf32, #tpu.memory_space<vmem>>, vector<72x128xf32>
    %c0_2 = arith.constant 0 : index
    %c0_3 = arith.constant 0 : index
    %4 = vector.load %arg2[%c0_2, %c0_3] : memref<72x128xbf16, #tpu.memory_space<vmem>>, vector<72x128xbf16>
    %c0_4 = arith.constant 0 : index
    %c0_5 = arith.constant 0 : index
    %5 = vector.load %arg3[%c0_4, %c0_5] : memref<128x128xbf16, #tpu.memory_space<vmem>>, vector<128x128xbf16>
    %cst = arith.constant dense<0.000000e+00> : vector<72x128xf32>
    %6 = tpu.matmul %4, %5, %cst {dimension_numbers = #tpu.dot_dimension_numbers<[1], [0], [0], [1], [0, 0, 1, 1], [], []>} : vector<72x128xbf16>, vector<128x128xbf16>, vector<72x128xf32> -> vector<72x128xf32>
    %7 = arith.addf %3, %6 : vector<72x128xf32>
    %c0_6 = arith.constant 0 : index
    %c0_7 = arith.constant 0 : index
    %8 = vector.load %arg5[%c0_6, %c0_7] : memref<72x128xf32, #tpu.memory_space<vmem>>, vector<72x128xf32>
    tpu.vector_store %arg5[%c0_6, %c0_7], %7 {strides = array<i32>} : memref<72x128xf32, #tpu.memory_space<vmem>>, vector<72x128xf32>,
    %c0_i32_8 = arith.constant 0 : i32
    %9 = arith.cmpi eq, %arg1, %c0_i32_8 : i32
    %10 = arith.extui %9 : i1 to i32
    %c0_i32_9 = arith.constant 0 : i32
    %11 = arith.cmpi ne, %10, %c0_i32_9 : i32
    scf.if %11 {
      %c0_10 = arith.constant 0 : index
      %c0_11 = arith.constant 0 : index
      %12 = vector.load %arg5[%c0_10, %c0_11] : memref<72x128xf32, #tpu.memory_space<vmem>>, vector<72x128xf32>
      %cst_12 = arith.constant 0.000000e+00 : f32
      %13 = vector.broadcast %cst_12 : f32 to vector<72x128xf32>
      %14 = arith.maximumf %12, %13 : vector<72x128xf32>
      %c0_13 = arith.constant 0 : index
      %c0_14 = arith.constant 0 : index
      %15 = vector.load %arg4[%c0_13, %c0_14] : memref<72x128xf32, #tpu.memory_space<vmem>>, vector<72x128xf32>
      tpu.vector_store %arg4[%c0_13, %c0_14], %14 {strides = array<i32>} : memref<72x128xf32, #tpu.memory_space<vmem>>, vector<72x128xf32>,
    } else {
    }
    return
  }
  func.func @transform_0(%arg0: i32, %arg1: i32) -> (i32, i32) {
    %c0_i32 = arith.constant 0 : i32
    return %arg0, %arg1 : i32, i32
  }
  func.func @transform_1(%arg0: i32, %arg1: i32) -> (i32, i32) {
    %c0_i32 = arith.constant 0 : i32
    %c0_i32_0 = arith.constant 0 : i32
    return %arg1, %c0_i32 : i32, i32
  }
  func.func @transform_2(%arg0: i32, %arg1: i32) -> (i32, i32) {
    %c0_i32 = arith.constant 0 : i32
    %c0_i32_0 = arith.constant 0 : i32
    return %arg0, %c0_i32 : i32, i32
  }
}

</mosaic_0001>

<llo_original>
// kernel: random_cnn2d_forward.1
$region0: #{random_cnn2d_forward.1}
  #allocation0 [shape = 'u32[]', space=smem, size = 0x4, offset = 0x4, fixed_abs, tag = 'smem constant byte address 0x4 - core index']
  #allocation1 [shape = 'u32[72,128]{1,0:T(1,128)}', space=vmem, size = 0x9000, scoped, tag = 'internal scratch']
  #allocation2 [shape = 'f32[72,128]{1,0:T(8,128)}', space=vmem, size = 0x9000, scoped, tag = 'scratch operand']
  %s0 = inlined_call_operand.vmem [shape: bf16[72,128], index: 0, kind: input, shape index: {}]
  %s1 = inlined_call_operand.vmem [shape: bf16[128,128], index: 1, kind: input, shape index: {}]
  %s2 = inlined_call_operand.vmem [shape: f32[72,128], index: 2, kind: output, shape index: {}]
  %s3 = sld [smem:[#allocation0]]
  $region26: #{random_cnn2d_forward.1} parent=0
    _
  %s5 = ssub.s32 1, %s3
  %s6 = scalar_select 0, %s5, %s3
  // Predicated region
  $region2: #{random_cnn2d_forward.1} parent=0 // pred_check
    _
  $region3: #{random_cnn2d_forward.1} parent=0 // pred_check_branch
    %8 = sbr.rel (0) target = $region5
  $region4: #{random_cnn2d_forward.1} parent=0 // pred_region
    _
  $region5: #{random_cnn2d_forward.1} parent=0 // pred_fallthru
    _
  // Predicated region
  $region6: #{random_cnn2d_forward.1} parent=0 // pred_check
    _
  $region7: #{random_cnn2d_forward.1} parent=0 // pred_check_branch
    %10 = sbr.rel (0) target = $region9
  $region8: #{random_cnn2d_forward.1} parent=0 // pred_region
    _
  $region9: #{random_cnn2d_forward.1} parent=0 // pred_fallthru
    _
  %p11 = scmp.eq.s32.totalorder 0, 0
  // Predicated region
  $region10: #{random_cnn2d_forward.1} parent=0 // pred_check
    %p12 = pneg %p11
  $region11: #{random_cnn2d_forward.1} parent=0 // pred_check_branch
    %14 = sbr.rel (%p12) target = $region13
  $region12: #{random_cnn2d_forward.1} parent=0 // pred_region
    %15 = vst [vmem:[#allocation2] sm:$0xff] 0.0
    %16 = vst [vmem:[#allocation2 + $0x8] sm:$0xff] 0.0
    %17 = vst [vmem:[#allocation2 + $0x10] sm:$0xff] 0.0
    %18 = vst [vmem:[#allocation2 + $0x18] sm:$0xff] 0.0
    %19 = vst [vmem:[#allocation2 + $0x20] sm:$0xff] 0.0
    %20 = vst [vmem:[#allocation2 + $0x28] sm:$0xff] 0.0
    %21 = vst [vmem:[#allocation2 + $0x30] sm:$0xff] 0.0
    %22 = vst [vmem:[#allocation2 + $0x38] sm:$0xff] 0.0
    %23 = vst [vmem:[#allocation2 + $0x40] sm:$0xff] 0.0
  $region13: #{random_cnn2d_forward.1} parent=0 // pred_fallthru
    _
  %v24 = vld [vmem:[#allocation2] sm:$0xff]
  %v25 = vld [vmem:[#allocation2 + $0x8] sm:$0xff]
  %v26 = vld [vmem:[#allocation2 + $0x10] sm:$0xff]
  %v27 = vld [vmem:[#allocation2 + $0x18] sm:$0xff]
  %v28 = vld [vmem:[#allocation2 + $0x20] sm:$0xff]
  %v29 = vld [vmem:[#allocation2 + $0x28] sm:$0xff]
  %v30 = vld [vmem:[#allocation2 + $0x30] sm:$0xff]
  %v31 = vld [vmem:[#allocation2 + $0x38] sm:$0xff]
  %v32 = vld [vmem:[#allocation2 + $0x40] sm:$0xff]
  %v33 = vld [vmem:[%s0] sm:$0xf]
  %v34 = vld [vmem:[%s0 + $0x4] sm:$0xf]
  %v35 = vld [vmem:[%s0 + $0x8] sm:$0xf]
  %v36 = vld [vmem:[%s0 + $0xc] sm:$0xf]
  %v37 = vld [vmem:[%s0 + $0x10] sm:$0xf]
  %v38 = vld [vmem:[%s0 + $0x14] sm:$0xf]
  %v39 = vld [vmem:[%s0 + $0x18] sm:$0xf]
  %v40 = vld [vmem:[%s0 + $0x1c] sm:$0xf]
  %v41 = vld [vmem:[%s0 + $0x20] sm:$0xf]
  %v42 = vld [vmem:[%s1] sm:$0xf]
  %v43 = vld [vmem:[%s1 + $0x4] sm:$0xf]
  %v44 = vld [vmem:[%s1 + $0x8] sm:$0xf]
  %v45 = vld [vmem:[%s1 + $0xc] sm:$0xf]
  %v46 = vld [vmem:[%s1 + $0x10] sm:$0xf]
  %v47 = vld [vmem:[%s1 + $0x14] sm:$0xf]
  %v48 = vld [vmem:[%s1 + $0x18] sm:$0xf]
  %v49 = vld [vmem:[%s1 + $0x1c] sm:$0xf]
  %v50 = vld [vmem:[%s1 + $0x20] sm:$0xf]
  %v51 = vld [vmem:[%s1 + $0x24] sm:$0xf]
  %v52 = vld [vmem:[%s1 + $0x28] sm:$0xf]
  %v53 = vld [vmem:[%s1 + $0x2c] sm:$0xf]
  %v54 = vld [vmem:[%s1 + $0x30] sm:$0xf]
  %v55 = vld [vmem:[%s1 + $0x34] sm:$0xf]
  %v56 = vld [vmem:[%s1 + $0x38] sm:$0xf]
  %v57 = vld [vmem:[%s1 + $0x3c] sm:$0xf]
  %v67 = vunpack.c.l.b16 %v33
  %v68 = vunpack.c.l.b16 %v34
  %v69 = vunpack.c.l.b16 %v35
  %v70 = vunpack.c.l.b16 %v36
  %v71 = vunpack.c.l.b16 %v37
  %v72 = vunpack.c.l.b16 %v38
  %v73 = vunpack.c.l.b16 %v39
  %v74 = vunpack.c.l.b16 %v40
  %v75 = vunpack.c.l.b16 %v41
  %v76 = vpack.c.b16 %v68, %v67
  %v77 = vpack.c.b16 %v70, %v69
  %v78 = vpack.c.b16 %v72, %v71
  %v79 = vpack.c.b16 %v74, %v73
  %v80 = vpack.c.b16 %v75, %v75
  %v102 = vunpack.c.l.b16 %v42
  %v103 = vunpack.c.l.b16 %v43
  %v104 = vunpack.c.l.b16 %v44
  %v105 = vunpack.c.l.b16 %v45
  %v106 = vunpack.c.l.b16 %v46
  %v107 = vunpack.c.l.b16 %v47
  %v108 = vunpack.c.l.b16 %v48
  %v109 = vunpack.c.l.b16 %v49
  %v110 = vunpack.c.l.b16 %v50
  %v111 = vunpack.c.l.b16 %v51
  %v112 = vunpack.c.l.b16 %v52
  %v113 = vunpack.c.l.b16 %v53
  %v114 = vunpack.c.l.b16 %v54
  %v115 = vunpack.c.l.b16 %v55
  %v116 = vunpack.c.l.b16 %v56
  %v117 = vunpack.c.l.b16 %v57
  %v118 = vpack.c.b16 %v103, %v102
  %v119 = vpack.c.b16 %v105, %v104
  %v120 = vpack.c.b16 %v107, %v106
  %v121 = vpack.c.b16 %v109, %v108
  %v122 = vpack.c.b16 %v111, %v110
  %v123 = vpack.c.b16 %v113, %v112
  %v124 = vpack.c.b16 %v115, %v114
  %v125 = vpack.c.b16 %v117, %v116
  %134 = vmatpush.bf16.msra.mxu0 %v125
  %135 = vmatpush.bf16.msra.mxu0 %v124
  %136 = vmatpush.bf16.msra.mxu0 %v123
  %137 = vmatpush.bf16.msra.mxu0 %v122
  %138 = vmatpush.bf16.msra.mxu0 %v121
  %139 = vmatpush.bf16.msra.mxu0 %v120
  %140 = vmatpush.bf16.msra.mxu0 %v119
  %141 = vmatpush.bf16.msra.mxu0 %v118
  %142 = vmatmul.bf16.gmra.mxu0 %v76
  %v143 = vpop.f32.mrf.mxu0
  %v144 = vadd.f32 0.0, %v143
  %v145 = vpop.f32.mrf.mxu0
  %v146 = vadd.f32 0.0, %v145
  %147 = vmatmul.bf16.gmra.mxu0 %v77
  %v148 = vpop.f32.mrf.mxu0
  %v149 = vadd.f32 0.0, %v148
  %v150 = vpop.f32.mrf.mxu0
  %v151 = vadd.f32 0.0, %v150
  %152 = vmatmul.bf16.gmra.mxu0 %v78
  %v153 = vpop.f32.mrf.mxu0
  %v154 = vadd.f32 0.0, %v153
  %v155 = vpop.f32.mrf.mxu0
  %v156 = vadd.f32 0.0, %v155
  %157 = vmatmul.bf16.gmra.mxu0 %v79
  %v158 = vpop.f32.mrf.mxu0
  %v159 = vadd.f32 0.0, %v158
  %v160 = vpop.f32.mrf.mxu0
  %v161 = vadd.f32 0.0, %v160
  %162 = vmatmul.bf16.gmra.mxu0 %v80
  %v163 = vpop.f32.mrf.mxu0
  %v164 = vadd.f32 0.0, %v163
  %v165 = vpop.f32.mrf.mxu0
  %166 = vdwg.mxu0
  %v167 = vadd.f32 %v24, %v144
  %v168 = vadd.f32 %v25, %v146
  %v169 = vadd.f32 %v26, %v149
  %v170 = vadd.f32 %v27, %v151
  %v171 = vadd.f32 %v28, %v154
  %v172 = vadd.f32 %v29, %v156
  %v173 = vadd.f32 %v30, %v159
  %v174 = vadd.f32 %v31, %v161
  %v175 = vadd.f32 %v32, %v164
  %176 = vst [vmem:[#allocation2] sm:$0xff] %v167
  %177 = vst [vmem:[#allocation2 + $0x8] sm:$0xff] %v168
  %178 = vst [vmem:[#allocation2 + $0x10] sm:$0xff] %v169
  %179 = vst [vmem:[#allocation2 + $0x18] sm:$0xff] %v170
  %180 = vst [vmem:[#allocation2 + $0x20] sm:$0xff] %v171
  %181 = vst [vmem:[#allocation2 + $0x28] sm:$0xff] %v172
  %182 = vst [vmem:[#allocation2 + $0x30] sm:$0xff] %v173
  %183 = vst [vmem:[#allocation2 + $0x38] sm:$0xff] %v174
  %184 = vst [vmem:[#allocation2 + $0x40] sm:$0xff] %v175
  // Predicated region
  $region14: #{random_cnn2d_forward.1} parent=0 // pred_check
    %p185 = pneg %p11
  $region15: #{random_cnn2d_forward.1} parent=0 // pred_check_branch
    %187 = sbr.rel (%p185) target = $region17
  $region16: #{random_cnn2d_forward.1} parent=0 // pred_region
    %v188 = vld [vmem:[#allocation2] sm:$0xff]
    %v189 = vld [vmem:[#allocation2 + $0x8] sm:$0xff]
    %v190 = vld [vmem:[#allocation2 + $0x10] sm:$0xff]
    %v191 = vld [vmem:[#allocation2 + $0x18] sm:$0xff]
    %v192 = vld [vmem:[#allocation2 + $0x20] sm:$0xff]
    %v193 = vld [vmem:[#allocation2 + $0x28] sm:$0xff]
    %v194 = vld [vmem:[#allocation2 + $0x30] sm:$0xff]
    %v195 = vld [vmem:[#allocation2 + $0x38] sm:$0xff]
    %v196 = vld [vmem:[#allocation2 + $0x40] sm:$0xff]
    %v197 = vmax.f32 %v188, 0.0
    %v198 = vmax.f32 %v189, 0.0
    %v199 = vmax.f32 %v190, 0.0
    %v200 = vmax.f32 %v191, 0.0
    %v201 = vmax.f32 %v192, 0.0
    %v202 = vmax.f32 %v193, 0.0
    %v203 = vmax.f32 %v194, 0.0
    %v204 = vmax.f32 %v195, 0.0
    %v205 = vmax.f32 %v196, 0.0
    %206 = vst [vmem:[%s2] sm:$0xff] %v197
    %207 = vst [vmem:[%s2 + $0x8] sm:$0xff] %v198
    %208 = vst [vmem:[%s2 + $0x10] sm:$0xff] %v199
    %209 = vst [vmem:[%s2 + $0x18] sm:$0xff] %v200
    %210 = vst [vmem:[%s2 + $0x20] sm:$0xff] %v201
    %211 = vst [vmem:[%s2 + $0x28] sm:$0xff] %v202
    %212 = vst [vmem:[%s2 + $0x30] sm:$0xff] %v203
    %213 = vst [vmem:[%s2 + $0x38] sm:$0xff] %v204
    %214 = vst [vmem:[%s2 + $0x40] sm:$0xff] %v205
  $region17: #{random_cnn2d_forward.1} parent=0 // pred_fallthru
    _
  // Predicated region
  $region18: #{random_cnn2d_forward.1} parent=0 // pred_check
    _
  $region19: #{random_cnn2d_forward.1} parent=0 // pred_check_branch
    %216 = sbr.rel (0) target = $region21
  $region20: #{random_cnn2d_forward.1} parent=0 // pred_region
    _
  $region21: #{random_cnn2d_forward.1} parent=0 // pred_fallthru
    _
  // Predicated region
  $region22: #{random_cnn2d_forward.1} parent=0 // pred_check
    _
  $region23: #{random_cnn2d_forward.1} parent=0 // pred_check_branch
    %218 = sbr.rel (0) target = $region25
  $region24: #{random_cnn2d_forward.1} parent=0 // pred_region
    _
  $region25: #{random_cnn2d_forward.1} parent=0 // pred_fallthru
    _

</llo_original>
